<compile_context>
chip_gen: v7x
topology: tpu7x:2x2x1
jax: 0.10.0
libtpu: 0.0.40
codegen_flags: <defaults>
</compile_context>

<pallas_src>
import jax
import jax.numpy as jnp
from jax.experimental import pallas as pl
from jax.experimental.pallas import tpu as pltpu


def din_attention_kernel(beh_ref, tgt_ref, w1_beh_ref, w1_prod_ref, w1_tgt_ref,
                         b1_ref, w2_ref, b2_ref, out_ref):
    TB, S, E = beh_ref.shape
    A = w1_beh_ref.shape[1]

    beh = beh_ref[...]                                   # (TB, S, E)
    tgt = tgt_ref[...]                                   # (TB, E)

    beh2d = beh.reshape(TB * S, E)                       # leading-dim merge, layout-preserving
    prod2d = (beh * tgt[:, None, :]).reshape(TB * S, E)  # beh * target (per batch)

    # First Linear(4E -> A), concat eliminated via folded weight slices.
    h2d = jnp.dot(beh2d, w1_beh_ref[...], preferred_element_type=jnp.float32)
    h2d = h2d + jnp.dot(prod2d, w1_prod_ref[...], preferred_element_type=jnp.float32)
    # Per-batch target contribution (+ bias), broadcast over the sequence axis.
    t_term = jnp.dot(tgt, w1_tgt_ref[...], preferred_element_type=jnp.float32) + b1_ref[...]
    h = h2d.reshape(TB, S, A) + t_term[:, None, :]       # (TB, S, A)
    h = jnp.maximum(h, 0.0)                              # ReLU

    # Second Linear(A -> 1): N=1 matmul replaced by multiply + lane reduction.
    logits = jnp.sum(h * w2_ref[...], axis=-1, keepdims=True) + b2_ref[0, 0]   # (TB, S, 1)
    attn = jax.nn.sigmoid(logits)                        # (TB, S, 1)

    # Weighted sum over the sequence axis -> (TB, E)
    out_ref[...] = jnp.sum(attn * beh, axis=1).astype(out_ref.dtype)


def _choose_tb(B, S, E, A, max_tb=None, vmem_budget_bytes=12 * 1024 * 1024,
               target_rows=512):
    """Pick TB (batches per grid step) dividing B.

    target_rows=512 comfortably fills MXU rows on v5e (128-wide) and v6e/v7x
    (256-wide); vmem_budget keeps the double-buffered behaviors slab + working
    set under the smallest default scoped-VMEM across generations.
    """
    # per-(TB*S)-row f32 bytes: behaviors (2 bufs) + product slab + h slab + slack
    bytes_per_row = 4 * (3 * E + 2 * A + E + 8)
    cap_rows = max(8, vmem_budget_bytes // bytes_per_row)
    rows = min(target_rows, cap_rows)
    tb = max(1, min(B, rows // max(S, 1)))
    if max_tb is not None:
        tb = max(1, min(tb, max_tb))
    while tb > 1 and B % tb != 0:
        tb -= 1
    return tb


def din_attention(behaviors, target, w1, b1, w2, b2, *, max_tb=None):
    """behaviors: [B, S, E], target: [B, E] -> weighted sum [B, E]."""
    B, S, E = behaviors.shape
    A = w1.shape[1]
    assert w1.shape == (4 * E, A)

    # Fold the concat([beh, tgt, beh*tgt, beh-tgt]) @ W1 into three (E, A) weights.
    w1a = w1[0 * E:1 * E]            # behaviors
    w1b = w1[1 * E:2 * E]            # target
    w1c = w1[2 * E:3 * E]            # behaviors * target
    w1d = w1[3 * E:4 * E]            # behaviors - target
    w1_beh = w1a + w1d               # multiplies beh
    w1_prod = w1c                    # multiplies beh*tgt
    w1_tgt = w1b - w1d               # multiplies tgt (per batch, broadcast over S)

    b1 = b1.reshape(1, A)
    w2_row = w2.reshape(1, A)
    b2 = b2.reshape(1, 1)

    TB = _choose_tb(B, S, E, A, max_tb=max_tb)
    grid = (B // TB,)

    return pl.pallas_call(
        din_attention_kernel,
        out_shape=jax.ShapeDtypeStruct((B, E), behaviors.dtype),
        grid_spec=pltpu.PrefetchScalarGridSpec(
            num_scalar_prefetch=0,
            grid=grid,
            in_specs=[
                pl.BlockSpec((TB, S, E), lambda i: (i, 0, 0)),   # behaviors slab
                pl.BlockSpec((TB, E), lambda i: (i, 0)),         # target rows
                pl.BlockSpec((E, A), lambda i: (0, 0)),          # W1 (beh), resident
                pl.BlockSpec((E, A), lambda i: (0, 0)),          # W1 (beh*tgt), resident
                pl.BlockSpec((E, A), lambda i: (0, 0)),          # W1 (tgt), resident
                pl.BlockSpec((1, A), lambda i: (0, 0)),          # b1
                pl.BlockSpec((1, A), lambda i: (0, 0)),          # W2 as a row
                pl.BlockSpec(memory_space=pltpu.MemorySpace.SMEM),  # b2 scalar in SMEM
            ],
            out_specs=pl.BlockSpec((TB, E), lambda i: (i, 0)),   # sublane-dense (TB>=8) output
        ),
        compiler_params=pltpu.CompilerParams(
            dimension_semantics=("parallel",),   # batch tiles split across TCs (v7x megacore)
        ),
    )(behaviors, target, w1_beh, w1_prod, w1_tgt, b1, w2_row, b2)


def reference(behaviors, target, w1, b1, w2, b2):
    """Pure-JAX reference mirroring the PyTorch forward."""
    t = target[:, None, :]                                   # (B, 1, E)
    t_rep = jnp.broadcast_to(t, behaviors.shape)             # (B, S, E)
    x = jnp.concatenate(
        [behaviors, t_rep, behaviors * t_rep, behaviors - t_rep], axis=-1
    )                                                        # (B, S, 4E)
    h = jax.nn.relu(x @ w1 + b1)                             # (B, S, A)
    w = jax.nn.sigmoid(h @ w2 + b2)                          # (B, S, 1)
    return jnp.sum(w * behaviors, axis=1)                    # (B, E)


if __name__ == "__main__":
    # Small shapes; B/TB chosen so the batch-tiled grid path (grid > 1) is exercised.
    B, S, E, A = 16, 8, 32, 64

    key = jax.random.PRNGKey(0)
    k_beh, k_tgt, k_w1, k_b1, k_w2, k_b2 = jax.random.split(key, 6)

    behaviors = jax.random.normal(k_beh, (B, S, E), dtype=jnp.float32)
    target = jax.random.normal(k_tgt, (B, E), dtype=jnp.float32)

    # Deterministic parameter init (Linear(4E->A), Linear(A->1)), Kaiming-ish scale.
    w1 = jax.random.normal(k_w1, (4 * E, A), dtype=jnp.float32) * (1.0 / jnp.sqrt(4 * E))
    b1 = jax.random.normal(k_b1, (A,), dtype=jnp.float32) * 0.01
    w2 = jax.random.normal(k_w2, (A, 1), dtype=jnp.float32) * (1.0 / jnp.sqrt(A))
    b2 = jax.random.normal(k_b2, (1,), dtype=jnp.float32) * 0.01

    out = din_attention(behaviors, target, w1, b1, w2, b2, max_tb=8)  # TB=8 -> grid=(2,)
    out = jax.block_until_ready(out)

    ref = reference(behaviors, target, w1, b1, w2, b2)
    assert out.shape == (B, E)
    # Folded-weight reassociation changes rounding by ~1 ulp vs the concat form.
    assert jnp.allclose(out, ref, atol=1e-4, rtol=1e-4), "mismatch vs reference"

    print("KERNEL_OK")
</pallas_src>

<mosaic_0001>
module attributes {stable_mosaic.version = 11 : i64} {
  func.func @din_attention_kernel(%arg0: i32, %arg1: memref<8x8x32xf32, #tpu.memory_space<vmem>>, %arg2: memref<8x32xf32, #tpu.memory_space<vmem>>, %arg3: memref<32x64xf32, #tpu.memory_space<vmem>>, %arg4: memref<32x64xf32, #tpu.memory_space<vmem>>, %arg5: memref<32x64xf32, #tpu.memory_space<vmem>>, %arg6: memref<1x64xf32, #tpu.memory_space<vmem>>, %arg7: memref<1x64xf32, #tpu.memory_space<vmem>>, %arg8: memref<1x1xf32, #tpu.memory_space<smem>>, %arg9: memref<8x32xf32, #tpu.memory_space<vmem>>) attributes {dimension_semantics = [#tpu.dimension_semantics<parallel>], iteration_bounds = array<i64: 2>, scalar_prefetch = 0 : i64, scratch_operands = 0 : i64, tpu.core_type = #tpu.core_type<tc>, window_params = [{transform_indices = @transform_0, window_bounds = array<i64: 8, 8, 32>}, {transform_indices = @transform_1, window_bounds = array<i64: 8, 32>}, {pipeline_mode = #tpu.pipeline_mode<synchronous>, transform_indices = @transform_2, window_bounds = array<i64: 32, 64>}, {pipeline_mode = #tpu.pipeline_mode<synchronous>, transform_indices = @transform_3, window_bounds = array<i64: 32, 64>}, {pipeline_mode = #tpu.pipeline_mode<synchronous>, transform_indices = @transform_4, window_bounds = array<i64: 32, 64>}, {pipeline_mode = #tpu.pipeline_mode<synchronous>, transform_indices = @transform_5, window_bounds = array<i64: 1, 64>}, {pipeline_mode = #tpu.pipeline_mode<synchronous>, transform_indices = @transform_6, window_bounds = array<i64: 1, 64>}, {transform_indices = @transform_7, window_bounds = array<i64: 1, 1>}, {transform_indices = @transform_8, window_bounds = array<i64: 8, 32>}]} {
    %c0 = arith.constant 0 : index
    %c0_0 = arith.constant 0 : index
    %c0_1 = arith.constant 0 : index
    %0 = vector.load %arg1[%c0, %c0_0, %c0_1] : memref<8x8x32xf32, #tpu.memory_space<vmem>>, vector<8x8x32xf32>
    %c0_2 = arith.constant 0 : index
    %c0_3 = arith.constant 0 : index
    %1 = vector.load %arg2[%c0_2, %c0_3] : memref<8x32xf32, #tpu.memory_space<vmem>>, vector<8x32xf32>
    %2 = vector.shape_cast %0 : vector<8x8x32xf32> to vector<64x32xf32>
    %3 = vector.shape_cast %1 : vector<8x32xf32> to vector<8x1x32xf32>
    %4 = vector.broadcast %3 : vector<8x1x32xf32> to vector<8x8x32xf32>
    %5 = arith.mulf %0, %4 : vector<8x8x32xf32>
    %6 = vector.shape_cast %5 : vector<8x8x32xf32> to vector<64x32xf32>
    %c0_4 = arith.constant 0 : index
    %c0_5 = arith.constant 0 : index
    %7 = vector.load %arg3[%c0_4, %c0_5] : memref<32x64xf32, #tpu.memory_space<vmem>>, vector<32x64xf32>
    %cst = arith.constant dense<0.000000e+00> : vector<64x64xf32>
    %8 = tpu.matmul %2, %7, %cst {dimension_numbers = #tpu.dot_dimension_numbers<[1], [0], [0], [1], [0, 0, 1, 1], [], []>} : vector<64x32xf32>, vector<32x64xf32>, vector<64x64xf32> -> vector<64x64xf32>
    %c0_6 = arith.constant 0 : index
    %c0_7 = arith.constant 0 : index
    %9 = vector.load %arg4[%c0_6, %c0_7] : memref<32x64xf32, #tpu.memory_space<vmem>>, vector<32x64xf32>
    %cst_8 = arith.constant dense<0.000000e+00> : vector<64x64xf32>
    %10 = tpu.matmul %6, %9, %cst_8 {dimension_numbers = #tpu.dot_dimension_numbers<[1], [0], [0], [1], [0, 0, 1, 1], [], []>} : vector<64x32xf32>, vector<32x64xf32>, vector<64x64xf32> -> vector<64x64xf32>
    %11 = arith.addf %8, %10 : vector<64x64xf32>
    %c0_9 = arith.constant 0 : index
    %c0_10 = arith.constant 0 : index
    %12 = vector.load %arg5[%c0_9, %c0_10] : memref<32x64xf32, #tpu.memory_space<vmem>>, vector<32x64xf32>
    %cst_11 = arith.constant dense<0.000000e+00> : vector<8x64xf32>
    %13 = tpu.matmul %1, %12, %cst_11 {dimension_numbers = #tpu.dot_dimension_numbers<[1], [0], [0], [1], [0, 0, 1, 1], [], []>} : vector<8x32xf32>, vector<32x64xf32>, vector<8x64xf32> -> vector<8x64xf32>
    %c0_12 = arith.constant 0 : index
    %c0_13 = arith.constant 0 : index
    %14 = vector.load %arg6[%c0_12, %c0_13] : memref<1x64xf32, #tpu.memory_space<vmem>>, vector<1x64xf32>
    %15 = vector.broadcast %14 : vector<1x64xf32> to vector<8x64xf32>
    %16 = arith.addf %13, %15 : vector<8x64xf32>
    %17 = vector.shape_cast %11 : vector<64x64xf32> to vector<8x8x64xf32>
    %18 = vector.shape_cast %16 : vector<8x64xf32> to vector<8x1x64xf32>
    %19 = vector.broadcast %18 : vector<8x1x64xf32> to vector<8x8x64xf32>
    %20 = arith.addf %17, %19 : vector<8x8x64xf32>
    %cst_14 = arith.constant 0.000000e+00 : f32
    %21 = vector.broadcast %cst_14 : f32 to vector<8x8x64xf32>
    %22 = arith.maximumf %20, %21 : vector<8x8x64xf32>
    %c0_15 = arith.constant 0 : index
    %c0_16 = arith.constant 0 : index
    %23 = vector.load %arg7[%c0_15, %c0_16] : memref<1x64xf32, #tpu.memory_space<vmem>>, vector<1x64xf32>
    %24 = vector.shape_cast %23 : vector<1x64xf32> to vector<1x1x64xf32>
    %25 = vector.broadcast %24 : vector<1x1x64xf32> to vector<8x8x64xf32>
    %26 = arith.mulf %22, %25 : vector<8x8x64xf32>
    %cst_17 = arith.constant dense<0.000000e+00> : vector<8x8xf32>
    %27 = vector.multi_reduction <add>, %26, %cst_17 [2] : vector<8x8x64xf32> to vector<8x8xf32>
    %28 = vector.shape_cast %27 : vector<8x8xf32> to vector<8x8x1xf32>
    %c0_18 = arith.constant 0 : index
    %c0_19 = arith.constant 0 : index
    %29 = memref.load %arg8[%c0_18, %c0_19] : memref<1x1xf32, #tpu.memory_space<smem>>
    %30 = vector.broadcast %29 : f32 to vector<8x8x1xf32>
    %31 = arith.addf %28, %30 : vector<8x8x1xf32>
    %32 = arith.negf %31 : vector<8x8x1xf32>
    %33 = math.exp %32 : vector<8x8x1xf32>
    %cst_20 = arith.constant 1.000000e+00 : f32
    %34 = vector.broadcast %cst_20 : f32 to vector<8x8x1xf32>
    %35 = arith.addf %34, %33 : vector<8x8x1xf32>
    %36 = arith.divf %34, %35 : vector<8x8x1xf32>
    %37 = vector.broadcast %36 : vector<8x8x1xf32> to vector<8x8x32xf32>
    %38 = arith.mulf %37, %0 : vector<8x8x32xf32>
    %cst_21 = arith.constant dense<0.000000e+00> : vector<8x32xf32>
    %39 = vector.multi_reduction <add>, %38, %cst_21 [1] : vector<8x8x32xf32> to vector<8x32xf32>
    %c0_22 = arith.constant 0 : index
    %c0_23 = arith.constant 0 : index
    %40 = vector.load %arg9[%c0_22, %c0_23] : memref<8x32xf32, #tpu.memory_space<vmem>>, vector<8x32xf32>
    tpu.vector_store %arg9[%c0_22, %c0_23], %39 {strides = array<i32>} : memref<8x32xf32, #tpu.memory_space<vmem>>, vector<8x32xf32>,
    return
  }
  func.func @transform_0(%arg0: i32) -> (i32, i32, i32) {
    %c0_i32 = arith.constant 0 : i32
    %c0_i32_0 = arith.constant 0 : i32
    %c0_i32_1 = arith.constant 0 : i32
    return %arg0, %c0_i32, %c0_i32_0 : i32, i32, i32
  }
  func.func @transform_1(%arg0: i32) -> (i32, i32) {
    %c0_i32 = arith.constant 0 : i32
    %c0_i32_0 = arith.constant 0 : i32
    return %arg0, %c0_i32 : i32, i32
  }
  func.func @transform_2(%arg0: i32) -> (i32, i32) {
    %c0_i32 = arith.constant 0 : i32
    %c0_i32_0 = arith.constant 0 : i32
    %c0_i32_1 = arith.constant 0 : i32
    return %c0_i32, %c0_i32_0 : i32, i32
  }
  func.func @transform_3(%arg0: i32) -> (i32, i32) {
    %c0_i32 = arith.constant 0 : i32
    %c0_i32_0 = arith.constant 0 : i32
    %c0_i32_1 = arith.constant 0 : i32
    return %c0_i32, %c0_i32_0 : i32, i32
  }
  func.func @transform_4(%arg0: i32) -> (i32, i32) {
    %c0_i32 = arith.constant 0 : i32
    %c0_i32_0 = arith.constant 0 : i32
    %c0_i32_1 = arith.constant 0 : i32
    return %c0_i32, %c0_i32_0 : i32, i32
  }
  func.func @transform_5(%arg0: i32) -> (i32, i32) {
    %c0_i32 = arith.constant 0 : i32
    %c0_i32_0 = arith.constant 0 : i32
    %c0_i32_1 = arith.constant 0 : i32
    return %c0_i32, %c0_i32_0 : i32, i32
  }
  func.func @transform_6(%arg0: i32) -> (i32, i32) {
    %c0_i32 = arith.constant 0 : i32
    %c0_i32_0 = arith.constant 0 : i32
    %c0_i32_1 = arith.constant 0 : i32
    return %c0_i32, %c0_i32_0 : i32, i32
  }
  func.func @transform_7(%arg0: i32) -> (i32, i32) {
    %c0_i32 = arith.constant 0 : i32
    %c0_i32_0 = arith.constant 0 : i32
    %c0_i32_1 = arith.constant 0 : i32
    return %c0_i32, %c0_i32_0 : i32, i32
  }
  func.func @transform_8(%arg0: i32) -> (i32, i32) {
    %c0_i32 = arith.constant 0 : i32
    %c0_i32_0 = arith.constant 0 : i32
    return %arg0, %c0_i32 : i32, i32
  }
}

</mosaic_0001>

<llo_original>
// kernel: tpu_custom_call.1
$region0: #{tpu_custom_call.1}
  #allocation0 [shape = 'u32[]', space=smem, size = 0x4, offset = 0x4, fixed_abs, tag = 'smem constant byte address 0x4 - core index']
  #allocation1 [shape = 'u32[144,128]{1,0:T(1,128)}', space=vmem, size = 0x12000, scoped, tag = 'internal scratch']
  #allocation2 [shape = 'f32[1,1]{1,0:T(1,128)S(6)}', space=smem, size = 0x200, scoped, tag = 'scoped memory for tpu_custom_call.1']
  %s0 = inlined_call_operand.hbm [shape: f32[16,8,32], index: 0, kind: input, shape index: {}]
  %s1 = inlined_call_operand.hbm [shape: f32[16,32], index: 1, kind: input, shape index: {}]
  %s2 = inlined_call_operand.hbm [shape: f32[32,64], index: 2, kind: input, shape index: {}]
  %s3 = inlined_call_operand.hbm [shape: f32[32,64], index: 3, kind: input, shape index: {}]
  %s4 = inlined_call_operand.hbm [shape: f32[32,64], index: 4, kind: input, shape index: {}]
  %s5 = inlined_call_operand.vmem [shape: f32[1,64], index: 5, kind: input, shape index: {}]
  %s6 = inlined_call_operand.vmem [shape: f32[1,64], index: 6, kind: input, shape index: {}]
  %s7 = inlined_call_operand.<no memory space> [shape: f32[1,1], index: 7, kind: input, shape index: {}]
  %s8 = inlined_call_operand.hbm [shape: f32[16,32], index: 8, kind: output, shape index: {}]
  %s9 = sld [smem:[#allocation0]]
  $region85: #{tpu_custom_call.1} parent=0
    _
  %s11 = ssub.s32 1, %s9
  %s12 = scalar_select 0, %s11, %s9
  %13 = sst [smem:[#allocation2]] %s7
  $region1: #{tpu_custom_call.1} parent=0
    #allocation3 [shape = 'u8[65536]{0}', space=vmem, size = 0x10000, scoped, tag = 'input window, operand 0']
    #allocation4 [shape = 's32[2]{0}', space=sflag, size = 0x8, scoped, tag = 'scoped memory for tpu_custom_call.1']
    #allocation5 [shape = 's32[2]{0}', space=sflag, size = 0x8, scoped, tag = 'scoped memory for tpu_custom_call.1']
    #allocation6 [shape = 'u8[8192]{0}', space=vmem, size = 0x2000, scoped, tag = 'input window, operand 1']
    #allocation7 [shape = 's32[2]{0}', space=sflag, size = 0x8, scoped, tag = 'scoped memory for tpu_custom_call.1']
    #allocation8 [shape = 'u8[16384]{0}', space=vmem, size = 0x4000, scoped, tag = 'input window, operand 2, single buffered']
    #allocation9 [shape = 'u8[16384]{0}', space=vmem, size = 0x4000, scoped, tag = 'input window, operand 3, single buffered']
    #allocation10 [shape = 's32[1]{0}', space=sflag, size = 0x4, scoped, tag = 'scoped memory for tpu_custom_call.1']
    #allocation11 [shape = 'u8[16384]{0}', space=vmem, size = 0x4000, scoped, tag = 'input window, operand 4, single buffered']
    #allocation12 [shape = 'u8[8192]{0}', space=vmem, size = 0x2000, scoped, tag = 'output window, operand 0']
    %14 = vsyncpa [#allocation4], 0
    %s15 = scalar_lea.sflag [#allocation4], 1
    %16 = vsyncpa %s15, 0
    %17 = vsyncpa [#allocation7], 0
    %s18 = scalar_lea.sflag [#allocation7], 1
    %19 = vsyncpa %s18, 0
    %20 = vsyncpa [#allocation10], 0
    %21 = vsyncpa [#allocation5], 0
    %s22 = scalar_lea.sflag [#allocation5], 1
    %23 = vsyncpa %s22, 0
    loop: start=0, step=1, limit=4
    $region2: #{tpu_custom_call.1} parent=1 // loop_pre_header
      _
    $region3: #{tpu_custom_call.1} parent=1 // loop_header
      %s25 = sphi 0, %s29
      %p26 = scmp.ge.s32.totalorder %s25, 4
      %s35 = sphi 0, %s37
      %s38 = sphi 0, %s35
      %s39 = sphi 0, %s38
      %s55 = sphi 0, %s39
      %s61 = sphi 0, %s63
      %s64 = sphi 0, %s61
      %s65 = sphi 0, %s64
      %s81 = sphi 0, %s65
      %s85 = sphi 0, %s85
      %s87 = sphi 0, %s85
      %s88 = sphi 0, %s87
      %s102 = sphi 0, %s88
      %s106 = sphi 0, %s106
      %s108 = sphi 0, %s106
      %s109 = sphi 0, %s108
      %s123 = sphi 0, %s109
      %s127 = sphi 0, %s127
      %s129 = sphi 0, %s127
      %s130 = sphi 0, %s129
      %s144 = sphi 0, %s130
      %s148 = sphi 0, %s148
      %s150 = sphi 0, %s148
      %s151 = sphi 0, %s150
      %s165 = sphi 0, %s151
      %s169 = sphi 0, %s169
      %s171 = sphi 0, %s169
      %s172 = sphi 0, %s171
      %s186 = sphi 0, %s172
      %s190 = sphi 0, %s190
      %s192 = sphi 0, %s190
      %s193 = sphi 0, %s192
      %s207 = sphi 0, %s193
      %s213 = sphi 0, %s215
      %s216 = sphi 0, %s213
      %s217 = sphi 0, %s216
      %s233 = sphi 0, %s217
    $region4: #{tpu_custom_call.1} parent=1 // loop_header_branch
      %28 = sbr.rel (%p26) target = $region8
    $region5: #{tpu_custom_call.1} parent=1 // loop_body
      %s30 = ssub.s32 %s25, 1
      %s31 = ssub.s32 %s25, 2
      %s32 = sadd.s32 %s25, 1
      %s33 = ssub.s32 %s25, %s32
      %p34 = scmp.eq.s32.totalorder %s33, 0
      %s36 = sadd.s32 %s35, 1
      %s37 = scalar_select %p34, %s35, %s36
      %p40 = pneg %p34
      %p41 = scmp.eq.s32.totalorder %s25, 1
      %p42 = por %p40, %p41
      %p43 = scmp.ne.s32.totalorder %s35, %s38
      %p44 = scmp.eq.s32.totalorder %s25, 0
      %p45 = por %p43, %p44
      %p46 = scmp.ne.s32.totalorder %s35, %s38
      %p47 = scmp.eq.s32.totalorder %s30, 1
      %p48 = por %p46, %p47
      %p49 = scmp.ne.s32.totalorder %s38, %s39
      %p50 = scmp.eq.s32.totalorder %s30, 0
      %p51 = por %p49, %p50
      %p52 = scmp.ne.s32.totalorder %s38, %s39
      %p53 = scmp.eq.s32.totalorder %s31, 1
      %p54 = por %p52, %p53
      %p56 = scmp.ne.s32.totalorder %s39, %s55
      %p57 = scmp.eq.s32.totalorder %s31, 0
      %p58 = por %p56, %p57
      %s59 = ssub.s32 %s25, %s32
      %p60 = scmp.eq.s32.totalorder %s59, 0
      %s62 = sadd.s32 %s61, 1
      %s63 = scalar_select %p60, %s61, %s62
      %p66 = pneg %p60
      %p67 = scmp.eq.s32.totalorder %s25, 1
      %p68 = por %p66, %p67
      %p69 = scmp.ne.s32.totalorder %s61, %s64
      %p70 = scmp.eq.s32.totalorder %s25, 0
      %p71 = por %p69, %p70
      %p72 = scmp.ne.s32.totalorder %s61, %s64
      %p73 = scmp.eq.s32.totalorder %s30, 1
      %p74 = por %p72, %p73
      %p75 = scmp.ne.s32.totalorder %s64, %s65
      %p76 = scmp.eq.s32.totalorder %s30, 0
      %p77 = por %p75, %p76
      %p78 = scmp.ne.s32.totalorder %s64, %s65
      %p79 = scmp.eq.s32.totalorder %s31, 1
      %p80 = por %p78, %p79
      %p82 = scmp.ne.s32.totalorder %s65, %s81
      %p83 = scmp.eq.s32.totalorder %s31, 0
      %p84 = por %p82, %p83
      %s86 = sadd.s32 %s85, 1
      %p89 = scmp.eq.s32.totalorder %s25, 1
      %p90 = scmp.ne.s32.totalorder %s85, %s87
      %p91 = scmp.eq.s32.totalorder %s25, 0
      %p92 = por %p90, %p91
      %p93 = scmp.ne.s32.totalorder %s85, %s87
      %p94 = scmp.eq.s32.totalorder %s30, 1
      %p95 = por %p93, %p94
      %p96 = scmp.ne.s32.totalorder %s87, %s88
      %p97 = scmp.eq.s32.totalorder %s30, 0
      %p98 = por %p96, %p97
      %p99 = scmp.ne.s32.totalorder %s87, %s88
      %p100 = scmp.eq.s32.totalorder %s31, 1
      %p101 = por %p99, %p100
      %p103 = scmp.ne.s32.totalorder %s88, %s102
      %p104 = scmp.eq.s32.totalorder %s31, 0
      %p105 = por %p103, %p104
      %s107 = sadd.s32 %s106, 1
      %p110 = scmp.eq.s32.totalorder %s25, 1
      %p111 = scmp.ne.s32.totalorder %s106, %s108
      %p112 = scmp.eq.s32.totalorder %s25, 0
      %p113 = por %p111, %p112
      %p114 = scmp.ne.s32.totalorder %s106, %s108
      %p115 = scmp.eq.s32.totalorder %s30, 1
      %p116 = por %p114, %p115
      %p117 = scmp.ne.s32.totalorder %s108, %s109
      %p118 = scmp.eq.s32.totalorder %s30, 0
      %p119 = por %p117, %p118
      %p120 = scmp.ne.s32.totalorder %s108, %s109
      %p121 = scmp.eq.s32.totalorder %s31, 1
      %p122 = por %p120, %p121
      %p124 = scmp.ne.s32.totalorder %s109, %s123
      %p125 = scmp.eq.s32.totalorder %s31, 0
      %p126 = por %p124, %p125
      %s128 = sadd.s32 %s127, 1
      %p131 = scmp.eq.s32.totalorder %s25, 1
      %p132 = scmp.ne.s32.totalorder %s127, %s129
      %p133 = scmp.eq.s32.totalorder %s25, 0
      %p134 = por %p132, %p133
      %p135 = scmp.ne.s32.totalorder %s127, %s129
      %p136 = scmp.eq.s32.totalorder %s30, 1
      %p137 = por %p135, %p136
      %p138 = scmp.ne.s32.totalorder %s129, %s130
      %p139 = scmp.eq.s32.totalorder %s30, 0
      %p140 = por %p138, %p139
      %p141 = scmp.ne.s32.totalorder %s129, %s130
      %p142 = scmp.eq.s32.totalorder %s31, 1
      %p143 = por %p141, %p142
      %p145 = scmp.ne.s32.totalorder %s130, %s144
      %p146 = scmp.eq.s32.totalorder %s31, 0
      %p147 = por %p145, %p146
      %s149 = sadd.s32 %s148, 1
      %p152 = scmp.eq.s32.totalorder %s25, 1
      %p153 = scmp.ne.s32.totalorder %s148, %s150
      %p154 = scmp.eq.s32.totalorder %s25, 0
      %p155 = por %p153, %p154
      %p156 = scmp.ne.s32.totalorder %s148, %s150
      %p157 = scmp.eq.s32.totalorder %s30, 1
      %p158 = por %p156, %p157
      %p159 = scmp.ne.s32.totalorder %s150, %s151
      %p160 = scmp.eq.s32.totalorder %s30, 0
      %p161 = por %p159, %p160
      %p162 = scmp.ne.s32.totalorder %s150, %s151
      %p163 = scmp.eq.s32.totalorder %s31, 1
      %p164 = por %p162, %p163
      %p166 = scmp.ne.s32.totalorder %s151, %s165
      %p167 = scmp.eq.s32.totalorder %s31, 0
      %p168 = por %p166, %p167
      %s170 = sadd.s32 %s169, 1
      %p173 = scmp.eq.s32.totalorder %s25, 1
      %p174 = scmp.ne.s32.totalorder %s169, %s171
      %p175 = scmp.eq.s32.totalorder %s25, 0
      %p176 = por %p174, %p175
      %p177 = scmp.ne.s32.totalorder %s169, %s171
      %p178 = scmp.eq.s32.totalorder %s30, 1
      %p179 = por %p177, %p178
      %p180 = scmp.ne.s32.totalorder %s171, %s172
      %p181 = scmp.eq.s32.totalorder %s30, 0
      %p182 = por %p180, %p181
      %p183 = scmp.ne.s32.totalorder %s171, %s172
      %p184 = scmp.eq.s32.totalorder %s31, 1
      %p185 = por %p183, %p184
      %p187 = scmp.ne.s32.totalorder %s172, %s186
      %p188 = scmp.eq.s32.totalorder %s31, 0
      %p189 = por %p187, %p188
      %s191 = sadd.s32 %s190, 1
      %p194 = scmp.eq.s32.totalorder %s25, 1
      %p195 = scmp.ne.s32.totalorder %s190, %s192
      %p196 = scmp.eq.s32.totalorder %s25, 0
      %p197 = por %p195, %p196
      %p198 = scmp.ne.s32.totalorder %s190, %s192
      %p199 = scmp.eq.s32.totalorder %s30, 1
      %p200 = por %p198, %p199
      %p201 = scmp.ne.s32.totalorder %s192, %s193
      %p202 = scmp.eq.s32.totalorder %s30, 0
      %p203 = por %p201, %p202
      %p204 = scmp.ne.s32.totalorder %s192, %s193
      %p205 = scmp.eq.s32.totalorder %s31, 1
      %p206 = por %p204, %p205
      %p208 = scmp.ne.s32.totalorder %s193, %s207
      %p209 = scmp.eq.s32.totalorder %s31, 0
      %p210 = por %p208, %p209
      %s211 = ssub.s32 %s25, %s32
      %p212 = scmp.eq.s32.totalorder %s211, 0
      %s214 = sadd.s32 %s213, 1
      %s215 = scalar_select %p212, %s213, %s214
      %p218 = pneg %p212
      %p219 = scmp.eq.s32.totalorder %s25, 1
      %p220 = por %p218, %p219
      %p221 = scmp.ne.s32.totalorder %s213, %s216
      %p222 = scmp.eq.s32.totalorder %s25, 0
      %p223 = por %p221, %p222
      %p224 = scmp.ne.s32.totalorder %s213, %s216
      %p225 = scmp.eq.s32.totalorder %s30, 1
      %p226 = por %p224, %p225
      %p227 = scmp.ne.s32.totalorder %s216, %s217
      %p228 = scmp.eq.s32.totalorder %s30, 0
      %p229 = por %p227, %p228
      %p230 = scmp.ne.s32.totalorder %s216, %s217
      %p231 = scmp.eq.s32.totalorder %s31, 1
      %p232 = por %p230, %p231
      %p234 = scmp.ne.s32.totalorder %s217, %s233
      %p235 = scmp.eq.s32.totalorder %s31, 0
      %p236 = por %p234, %p235
      %p237 = scmp.le.s32.totalorder 1, %s25
      %p238 = scmp.lt.s32.totalorder %s25, 3
      %p239 = pnand %p237, %p238
      %p240 = pneg %p239
      // Predicated region
      $region9: #{tpu_custom_call.1} parent=5 // pred_check
        _
      $region10: #{tpu_custom_call.1} parent=5 // pred_check_branch
        %242 = sbr.rel (%p239) target = $region12
      $region11: #{tpu_custom_call.1} parent=5 // pred_region
        %s243 = ssub.s32 %s25, 1
        // Predicated region
        $region13: #{tpu_custom_call.1} parent=11 // pred_check
          %p244 = pneg %p98
        $region14: #{tpu_custom_call.1} parent=11 // pred_check_branch
          %246 = sbr.rel (%p244) target = $region16
        $region15: #{tpu_custom_call.1} parent=11 // pred_region
          %s248 = ssub.s32 512, 512
          %249 = vsyncadd [#allocation7], %s248
          %s250 = sshll.u32 [#allocation8], 4
          %s251 = int_to_ptr.vmem [resolvable:$true] %s250
          %256 = dma.hbm_to_vmem [thread:$0]  %s2, 512, %s251, [#allocation7], 128, 128, 8
        $region16: #{tpu_custom_call.1} parent=11 // pred_fallthru
          _
        // Predicated region
        $region17: #{tpu_custom_call.1} parent=11 // pred_check
          %p257 = pneg %p119
        $region18: #{tpu_custom_call.1} parent=11 // pred_check_branch
          %259 = sbr.rel (%p257) target = $region20
        $region19: #{tpu_custom_call.1} parent=11 // pred_region
          %s261 = ssub.s32 512, 512
          %262 = vsyncadd [#allocation10], %s261
          %s263 = sshll.u32 [#allocation9], 4
          %s264 = int_to_ptr.vmem [resolvable:$true] %s263
          %269 = dma.hbm_to_vmem [thread:$0]  %s3, 512, %s264, [#allocation10], 128, 128, 8
        $region20: #{tpu_custom_call.1} parent=11 // pred_fallthru
          _
        // Predicated region
        $region21: #{tpu_custom_call.1} parent=11 // pred_check
          %p270 = pneg %p140
        $region22: #{tpu_custom_call.1} parent=11 // pred_check_branch
          %272 = sbr.rel (%p270) target = $region24
        $region23: #{tpu_custom_call.1} parent=11 // pred_region
          %s274 = ssub.s32 512, 512
          %275 = vsyncadd [#allocation10], %s274
          %s276 = sshll.u32 [#allocation11], 4
          %s277 = int_to_ptr.vmem [resolvable:$true] %s276
          %282 = dma.hbm_to_vmem [thread:$0]  %s4, 512, %s277, [#allocation10], 128, 128, 8
        $region24: #{tpu_custom_call.1} parent=11 // pred_fallthru
          _
        // Predicated region
        $region25: #{tpu_custom_call.1} parent=11 // pred_check
          %p283 = pneg %p161
        $region26: #{tpu_custom_call.1} parent=11 // pred_check_branch
          %285 = sbr.rel (%p283) target = $region28
        $region27: #{tpu_custom_call.1} parent=11 // pred_region
          _
        $region28: #{tpu_custom_call.1} parent=11 // pred_fallthru
          _
        // Predicated region
        $region29: #{tpu_custom_call.1} parent=11 // pred_check
          %p286 = pneg %p182
        $region30: #{tpu_custom_call.1} parent=11 // pred_check_branch
          %288 = sbr.rel (%p286) target = $region32
        $region31: #{tpu_custom_call.1} parent=11 // pred_region
          _
        $region32: #{tpu_custom_call.1} parent=11 // pred_fallthru
          _
        // Predicated region
        $region33: #{tpu_custom_call.1} parent=11 // pred_check
          %p289 = pneg %p203
        $region34: #{tpu_custom_call.1} parent=11 // pred_check_branch
          %291 = sbr.rel (%p289) target = $region36
        $region35: #{tpu_custom_call.1} parent=11 // pred_region
          _
        $region36: #{tpu_custom_call.1} parent=11 // pred_fallthru
          _
      $region12: #{tpu_custom_call.1} parent=5 // pred_fallthru
        _
      %p292 = scmp.lt.s32.totalorder %s25, 2
      // Predicated region
      $region37: #{tpu_custom_call.1} parent=5 // pred_check
        %p293 = pneg %p292
      $region38: #{tpu_custom_call.1} parent=5 // pred_check_branch
        %295 = sbr.rel (%p293) target = $region40
      $region39: #{tpu_custom_call.1} parent=5 // pred_region
        // Predicated region
        $region41: #{tpu_custom_call.1} parent=39 // pred_check
          %p296 = pneg %p45
        $region42: #{tpu_custom_call.1} parent=39 // pred_check_branch
          %298 = sbr.rel (%p296) target = $region44
        $region43: #{tpu_custom_call.1} parent=39 // pred_region
          %s299 = sand.u32 %s35, 1
          %s300 = scalar_lea.sflag [#allocation4], %s299
          %s301 = sand.u32 %s35, 1
          %s302 = smul.addr %s301, 64
          %s303 = scalar_lea.vmem [#allocation3], %s302
          %s304 = smul.u32 8, %s25
          %s306 = ssub.s32 1024, 1024
          %307 = vsyncadd %s300, %s306
          %s308 = smul.addr %s304, 128
          %s309 = scalar_lea.hbm %s0, %s308
          %s310 = sshll.u32 %s303, 4
          %s311 = int_to_ptr.vmem [resolvable:$true] %s310
          %316 = dma.hbm_to_vmem [thread:$0]  %s309, 1024, %s311, %s300, 128, 128, 8
        $region44: #{tpu_custom_call.1} parent=39 // pred_fallthru
          _
        // Predicated region
        $region45: #{tpu_custom_call.1} parent=39 // pred_check
          %p317 = pneg %p71
        $region46: #{tpu_custom_call.1} parent=39 // pred_check_branch
          %319 = sbr.rel (%p317) target = $region48
        $region47: #{tpu_custom_call.1} parent=39 // pred_region
          %s320 = sand.u32 %s25, 1
          %s321 = scalar_lea.sflag [#allocation7], %s320
          %s322 = sand.u32 %s61, 1
          %s323 = smul.addr %s322, 8
          %s324 = scalar_lea.vmem [#allocation6], %s323
          %s326 = ssub.s32 128, 128
          %327 = vsyncadd %s321, %s326
          %s328 = smul.addr %s25, 128
          %s329 = scalar_lea.hbm %s1, %s328
          %s331 = sshll.u32 %s324, 4
          %s332 = int_to_ptr.vmem [resolvable:$true] %s331
          %334 = dma.hbm_to_vmem [thread:$0]  %s329, 128, %s332, %s321
        $region48: #{tpu_custom_call.1} parent=39 // pred_fallthru
          _
      $region40: #{tpu_custom_call.1} parent=5 // pred_fallthru
        _
      %p335 = scmp.le.s32.totalorder 1, %s25
      %p336 = scmp.lt.s32.totalorder %s25, 3
      %p337 = pnand %p335, %p336
      %p338 = pneg %p337
      // Predicated region
      $region49: #{tpu_custom_call.1} parent=5 // pred_check
        _
      $region50: #{tpu_custom_call.1} parent=5 // pred_check_branch
        %340 = sbr.rel (%p337) target = $region52
      $region51: #{tpu_custom_call.1} parent=5 // pred_region
        %s341 = ssub.s32 %s25, 1
        %s342 = sand.u32 %s38, 1
        %s343 = scalar_lea.sflag [#allocation4], %s342
        %s344 = sand.u32 %s38, 1
        %s345 = smul.addr %s344, 64
        %s346 = scalar_lea.vmem [#allocation3], %s345
        // Predicated region
        $region53: #{tpu_custom_call.1} parent=51 // pred_check
          %p347 = pneg %p51
        $region54: #{tpu_custom_call.1} parent=51 // pred_check_branch
          %349 = sbr.rel (%p347) target = $region56
        $region55: #{tpu_custom_call.1} parent=51 // pred_region
          %350 = dma.done %s343, 1024
        $region56: #{tpu_custom_call.1} parent=51 // pred_fallthru
          _
        %s351 = sand.u32 %s30, 1
        %s352 = scalar_lea.sflag [#allocation7], %s351
        %s353 = sand.u32 %s64, 1
        %s354 = smul.addr %s353, 8
        %s355 = scalar_lea.vmem [#allocation6], %s354
        // Predicated region
        $region57: #{tpu_custom_call.1} parent=51 // pred_check
          %p356 = pneg %p77
        $region58: #{tpu_custom_call.1} parent=51 // pred_check_branch
          %358 = sbr.rel (%p356) target = $region60
        $region59: #{tpu_custom_call.1} parent=51 // pred_region
          %359 = dma.done %s352, 128
        $region60: #{tpu_custom_call.1} parent=51 // pred_fallthru
          _
        // Predicated region
        $region61: #{tpu_custom_call.1} parent=51 // pred_check
          %p360 = pneg %p98
        $region62: #{tpu_custom_call.1} parent=51 // pred_check_branch
          %362 = sbr.rel (%p360) target = $region64
        $region63: #{tpu_custom_call.1} parent=51 // pred_region
          %363 = dma.done [#allocation7], 512
        $region64: #{tpu_custom_call.1} parent=51 // pred_fallthru
          _
        // Predicated region
        $region65: #{tpu_custom_call.1} parent=51 // pred_check
          %p364 = pneg %p119
        $region66: #{tpu_custom_call.1} parent=51 // pred_check_branch
          %366 = sbr.rel (%p364) target = $region68
        $region67: #{tpu_custom_call.1} parent=51 // pred_region
          %367 = dma.done [#allocation10], 512
        $region68: #{tpu_custom_call.1} parent=51 // pred_fallthru
          _
        // Predicated region
        $region69: #{tpu_custom_call.1} parent=51 // pred_check
          %p368 = pneg %p140
        $region70: #{tpu_custom_call.1} parent=51 // pred_check_branch
          %370 = sbr.rel (%p368) target = $region72
        $region71: #{tpu_custom_call.1} parent=51 // pred_region
          %371 = dma.done [#allocation10], 512
        $region72: #{tpu_custom_call.1} parent=51 // pred_fallthru
          _
        %s372 = sand.u32 %s38, 1
        %s373 = scalar_lea.sflag [#allocation4], %s372
        %s374 = sand.u32 %s38, 1
        %s375 = smul.addr %s374, 64
        %s376 = scalar_lea.vmem [#allocation3], %s375
        %p377 = pneg %p51
        %p378 = pneg %p48
        %s379 = sand.u32 %s30, 1
        %s380 = scalar_lea.sflag [#allocation7], %s379
        %s381 = sand.u32 %s64, 1
        %s382 = smul.addr %s381, 8
        %s383 = scalar_lea.vmem [#allocation6], %s382
        %p384 = pneg %p77
        %p385 = pneg %p74
        %p386 = pneg %p98
        %p387 = pneg %p95
        %p388 = pneg %p119
        %p389 = pneg %p116
        %p390 = pneg %p140
        %p391 = pneg %p137
        %p392 = pneg %p161
        %p393 = pneg %p158
        %p394 = pneg %p182
        %p395 = pneg %p179
        %p396 = pneg %p203
        %p397 = pneg %p200
        %p398 = pneg %p229
        %p399 = pneg %p226
        %s400 = sand.u32 %s216, 1
        %s401 = scalar_lea.sflag [#allocation5], %s400
        %s402 = sand.u32 %s216, 1
        %s403 = smul.addr %s402, 8
        %s404 = scalar_lea.vmem [#allocation12], %s403
        %s405 = smul.u32 8, %s30
        %v406 = vld [vmem:[%s346] sm:$0xff]
        %v407 = vld [vmem:[%s346 + $0x8] sm:$0xff]
        %v408 = vld [vmem:[%s346 + $0x10] sm:$0xff]
        %v409 = vld [vmem:[%s346 + $0x18] sm:$0xff]
        %v410 = vld [vmem:[%s346 + $0x20] sm:$0xff]
        %v411 = vld [vmem:[%s346 + $0x28] sm:$0xff]
        %v412 = vld [vmem:[%s346 + $0x30] sm:$0xff]
        %v413 = vld [vmem:[%s346 + $0x38] sm:$0xff]
        %v414 = vld [vmem:[%s355] sm:$0xff]
        %v416 = vcombine.high %v414, %v414
        %v418 = vunpack.c.l.s4 1966171168
        %v419 = vunpack.c.0.s8 %v418
        %v420 = vlaneseq
        %v421 = vshrl.u32 %v420, 7
        %v422 = vsub.s32 %v419, %v421
        %v423 = vrot.slane %v414, %v422
        %v425 = vunpack.c.l.s4 1966171168
        %v426 = vunpack.c.0.s8 %v425
        %v427 = vlaneseq
        %v428 = vshrl.u32 %v427, 7
        %v429 = vsub.s32 %v426, %v428
        %v430 = vrot.slane %v416, %v429
        %v431 = vcombine.high %v423, %v423
        %v432 = vcombine.high %v430, %v430
        %v434 = vunpack.c.l.s4 1966171168
        %v435 = vunpack.c.0.s8 %v434
        %v436 = vlaneseq
        %v437 = vshrl.u32 %v436, 7
        %v438 = vsub.s32 %v435, %v437
        %v439 = vrot.slane %v423, %v438
        %v441 = vunpack.c.l.s4 1966171168
        %v442 = vunpack.c.0.s8 %v441
        %v443 = vlaneseq
        %v444 = vshrl.u32 %v443, 7
        %v445 = vsub.s32 %v442, %v444
        %v446 = vrot.slane %v430, %v445
        %v448 = vunpack.c.l.s4 1966171168
        %v449 = vunpack.c.0.s8 %v448
        %v450 = vlaneseq
        %v451 = vshrl.u32 %v450, 7
        %v452 = vsub.s32 %v449, %v451
        %v453 = vrot.slane %v431, %v452
        %v455 = vunpack.c.l.s4 1966171168
        %v456 = vunpack.c.0.s8 %v455
        %v457 = vlaneseq
        %v458 = vshrl.u32 %v457, 7
        %v459 = vsub.s32 %v456, %v458
        %v460 = vrot.slane %v432, %v459
        %v461 = vcombine.high %v439, %v439
        %v462 = vcombine.high %v446, %v446
        %v463 = vcombine.high %v453, %v453
        %v464 = vcombine.high %v460, %v460
        %v465 = vlaneseq
        %v466 = vshrl.u32 %v465, 7
        %v467 = vsub.s32 0, %v466
        %v468 = vrot.slane %v439, %v467
        %v469 = vlaneseq
        %v470 = vshrl.u32 %v469, 7
        %v471 = vsub.s32 0, %v470
        %v472 = vrot.slane %v453, %v471
        %v473 = vlaneseq
        %v474 = vshrl.u32 %v473, 7
        %v475 = vsub.s32 0, %v474
        %v476 = vrot.slane %v461, %v475
        %v477 = vlaneseq
        %v478 = vshrl.u32 %v477, 7
        %v479 = vsub.s32 0, %v478
        %v480 = vrot.slane %v463, %v479
        %v481 = vlaneseq
        %v482 = vshrl.u32 %v481, 7
        %v483 = vsub.s32 0, %v482
        %v484 = vrot.slane %v446, %v483
        %v485 = vlaneseq
        %v486 = vshrl.u32 %v485, 7
        %v487 = vsub.s32 0, %v486
        %v488 = vrot.slane %v460, %v487
        %v489 = vlaneseq
        %v490 = vshrl.u32 %v489, 7
        %v491 = vsub.s32 0, %v490
        %v492 = vrot.slane %v462, %v491
        %v493 = vlaneseq
        %v494 = vshrl.u32 %v493, 7
        %v495 = vsub.s32 0, %v494
        %v496 = vrot.slane %v464, %v495
        %v505 = vmul.f32 %v406, %v468
        %v506 = vmul.f32 %v407, %v472
        %v507 = vmul.f32 %v408, %v476
        %v508 = vmul.f32 %v409, %v480
        %v509 = vmul.f32 %v410, %v484
        %v510 = vmul.f32 %v411, %v488
        %v511 = vmul.f32 %v412, %v492
        %v512 = vmul.f32 %v413, %v496
        %v513 = vld [vmem:[#allocation8] sm:$0xff]
        %v514 = vld [vmem:[#allocation8 + $0x8] sm:$0xff]
        %v515 = vld [vmem:[#allocation8 + $0x10] sm:$0xff]
        %v516 = vld [vmem:[#allocation8 + $0x18] sm:$0xff]
        %v517 = vld [vmem:[#allocation9] sm:$0xff]
        %v518 = vld [vmem:[#allocation9 + $0x8] sm:$0xff]
        %v519 = vld [vmem:[#allocation9 + $0x10] sm:$0xff]
        %v520 = vld [vmem:[#allocation9 + $0x18] sm:$0xff]
        %vm521 = vcmask 261120
        %v523 = vsel %vm521, %v505, 0
        %v526 = vsel %vm521, %v506, 0
        %v529 = vsel %vm521, %v507, 0
        %v532 = vsel %vm521, %v508, 0
        %v535 = vsel %vm521, %v509, 0
        %v538 = vsel %vm521, %v510, 0
        %v541 = vsel %vm521, %v511, 0
        %v544 = vsel %vm521, %v512, 0
        %546 = vmatprep.subr.mxu0 0.0
        %547 = vmatpush1.msra.mxu0 %v517
        %548 = vmatprep.subr.mxu0 0.0
        %549 = vmatpush1.msra.mxu0 %v518
        %550 = vmatprep.subr.mxu0 0.0
        %551 = vmatpush1.msra.mxu0 %v519
        %552 = vmatprep.subr.mxu0 0.0
        %553 = vmatpush1.msra.mxu0 %v520
        %554 = vmatprep.subr.mxu0 0.0
        %555 = vmatpush1.msra.mxu0 0.0
        %556 = vmatprep.subr.mxu0 0.0
        %557 = vmatpush1.msra.mxu0 0.0
        %558 = vmatprep.subr.mxu0 0.0
        %559 = vmatpush1.msra.mxu0 0.0
        %560 = vmatprep.subr.mxu0 0.0
        %561 = vmatpush1.msra.mxu0 0.0
        %562 = vmatprep.subr.mxu0 0.0
        %563 = vmatpush1.msra.mxu0 0.0
        %564 = vmatprep.subr.mxu0 0.0
        %565 = vmatpush1.msra.mxu0 0.0
        %566 = vmatprep.subr.mxu0 0.0
        %567 = vmatpush1.msra.mxu0 0.0
        %568 = vmatprep.subr.mxu0 0.0
        %569 = vmatpush1.msra.mxu0 0.0
        %570 = vmatprep.subr.mxu0 0.0
        %571 = vmatpush1.msra.mxu0 0.0
        %572 = vmatprep.subr.mxu0 0.0
        %573 = vmatpush1.msra.mxu0 0.0
        %574 = vmatprep.subr.mxu0 0.0
        %575 = vmatpush1.msra.mxu0 0.0
        %576 = vmatprep.subr.mxu0 0.0
        %577 = vmatpush1.msra.mxu0 0.0
        %578 = vmatprep.subr.mxu0 0.0
        %579 = vmatpush1.msra.mxu0 0.0
        %580 = vmatprep.subr.mxu0 0.0
        %581 = vmatpush1.msra.mxu0 0.0
        %582 = vmatprep.subr.mxu0 0.0
        %583 = vmatpush1.msra.mxu0 0.0
        %584 = vmatprep.subr.mxu0 0.0
        %585 = vmatpush1.msra.mxu0 0.0
        %586 = vmatprep.subr.mxu0 0.0
        %587 = vmatpush1.msra.mxu0 0.0
        %588 = vmatprep.subr.mxu0 0.0
        %589 = vmatpush1.msra.mxu0 0.0
        %590 = vmatprep.subr.mxu0 0.0
        %591 = vmatpush1.msra.mxu0 0.0
        %592 = vmatprep.subr.mxu0 0.0
        %593 = vmatpush1.msra.mxu0 0.0
        %594 = vmatprep.subr.mxu0 0.0
        %595 = vmatpush1.msra.mxu0 0.0
        %596 = vmatprep.subr.mxu0 0.0
        %597 = vmatpush1.msra.mxu0 0.0
        %598 = vmatprep.subr.mxu0 0.0
        %599 = vmatpush1.msra.mxu0 0.0
        %600 = vmatprep.subr.mxu0 0.0
        %601 = vmatpush1.msra.mxu0 0.0
        %602 = vmatprep.subr.mxu0 0.0
        %603 = vmatpush1.msra.mxu0 0.0
        %604 = vmatprep.subr.mxu0 0.0
        %605 = vmatpush1.msra.mxu0 0.0
        %606 = vmatprep.subr.mxu0 0.0
        %607 = vmatpush1.msra.mxu0 0.0
        %608 = vmatprep.subr.mxu0 0.0
        %609 = vmatpush1.msra.mxu0 0.0
        %610 = vmatprep.mubr.f32.mxu0 0.0
        %611 = vmatmul.mubr.f32.gmra.mrb[0].mxu0 %v523
        %v612 = vpop.f32.mrb[0].mxu0
        %v613 = vadd.f32 0.0, %v612
        %v614 = vpop.f32.mrb[0].mxu0
        %615 = vmatprep.mubr.f32.mxu0 0.0
        %616 = vmatmul.mubr.f32.gmra.mrb[0].mxu0 %v526
        %v617 = vpop.f32.mrb[0].mxu0
        %v618 = vadd.f32 0.0, %v617
        %v619 = vpop.f32.mrb[0].mxu0
        %620 = vmatprep.mubr.f32.mxu0 0.0
        %621 = vmatmul.mubr.f32.gmra.mrb[0].mxu0 %v529
        %v622 = vpop.f32.mrb[0].mxu0
        %v623 = vadd.f32 0.0, %v622
        %v624 = vpop.f32.mrb[0].mxu0
        %625 = vmatprep.mubr.f32.mxu0 0.0
        %626 = vmatmul.mubr.f32.gmra.mrb[0].mxu0 %v532
        %v627 = vpop.f32.mrb[0].mxu0
        %v628 = vadd.f32 0.0, %v627
        %v629 = vpop.f32.mrb[0].mxu0
        %630 = vmatprep.mubr.f32.mxu0 0.0
        %631 = vmatmul.mubr.f32.gmra.mrb[0].mxu0 %v535
        %v632 = vpop.f32.mrb[0].mxu0
        %v633 = vadd.f32 0.0, %v632
        %v634 = vpop.f32.mrb[0].mxu0
        %635 = vmatprep.mubr.f32.mxu0 0.0
        %636 = vmatmul.mubr.f32.gmra.mrb[0].mxu0 %v538
        %v637 = vpop.f32.mrb[0].mxu0
        %v638 = vadd.f32 0.0, %v637
        %v639 = vpop.f32.mrb[0].mxu0
        %640 = vmatprep.mubr.f32.mxu0 0.0
        %641 = vmatmul.mubr.f32.gmra.mrb[0].mxu0 %v541
        %v642 = vpop.f32.mrb[0].mxu0
        %v643 = vadd.f32 0.0, %v642
        %v644 = vpop.f32.mrb[0].mxu0
        %645 = vmatprep.mubr.f32.mxu0 0.0
        %646 = vmatmul.mubr.f32.gmra.mrb[0].mxu0 %v544
        %v647 = vpop.f32.mrb[0].mxu0
        %v648 = vadd.f32 0.0, %v647
        %v649 = vpop.f32.mrb[0].mxu0
        %650 = vdwg.mxu0
        %v652 = vsel %vm521, %v406, 0
        %v655 = vsel %vm521, %v407, 0
        %v658 = vsel %vm521, %v408, 0
        %v661 = vsel %vm521, %v409, 0
        %v664 = vsel %vm521, %v410, 0
        %v667 = vsel %vm521, %v411, 0
        %v670 = vsel %vm521, %v412, 0
        %v673 = vsel %vm521, %v413, 0
        %675 = vmatprep.subr.mxu0 0.0
        %676 = vmatpush1.msra.mxu0 %v513
        %677 = vmatprep.subr.mxu0 0.0
        %678 = vmatpush1.msra.mxu0 %v514
        %679 = vmatprep.subr.mxu0 0.0
        %680 = vmatpush1.msra.mxu0 %v515
        %681 = vmatprep.subr.mxu0 0.0
        %682 = vmatpush1.msra.mxu0 %v516
        %683 = vmatprep.subr.mxu0 0.0
        %684 = vmatpush1.msra.mxu0 0.0
        %685 = vmatprep.subr.mxu0 0.0
        %686 = vmatpush1.msra.mxu0 0.0
        %687 = vmatprep.subr.mxu0 0.0
        %688 = vmatpush1.msra.mxu0 0.0
        %689 = vmatprep.subr.mxu0 0.0
        %690 = vmatpush1.msra.mxu0 0.0
        %691 = vmatprep.subr.mxu0 0.0
        %692 = vmatpush1.msra.mxu0 0.0
        %693 = vmatprep.subr.mxu0 0.0
        %694 = vmatpush1.msra.mxu0 0.0
        %695 = vmatprep.subr.mxu0 0.0
        %696 = vmatpush1.msra.mxu0 0.0
        %697 = vmatprep.subr.mxu0 0.0
        %698 = vmatpush1.msra.mxu0 0.0
        %699 = vmatprep.subr.mxu0 0.0
        %700 = vmatpush1.msra.mxu0 0.0
        %701 = vmatprep.subr.mxu0 0.0
        %702 = vmatpush1.msra.mxu0 0.0
        %703 = vmatprep.subr.mxu0 0.0
        %704 = vmatpush1.msra.mxu0 0.0
        %705 = vmatprep.subr.mxu0 0.0
        %706 = vmatpush1.msra.mxu0 0.0
        %707 = vmatprep.subr.mxu0 0.0
        %708 = vmatpush1.msra.mxu0 0.0
        %709 = vmatprep.subr.mxu0 0.0
        %710 = vmatpush1.msra.mxu0 0.0
        %711 = vmatprep.subr.mxu0 0.0
        %712 = vmatpush1.msra.mxu0 0.0
        %713 = vmatprep.subr.mxu0 0.0
        %714 = vmatpush1.msra.mxu0 0.0
        %715 = vmatprep.subr.mxu0 0.0
        %716 = vmatpush1.msra.mxu0 0.0
        %717 = vmatprep.subr.mxu0 0.0
        %718 = vmatpush1.msra.mxu0 0.0
        %719 = vmatprep.subr.mxu0 0.0
        %720 = vmatpush1.msra.mxu0 0.0
        %721 = vmatprep.subr.mxu0 0.0
        %722 = vmatpush1.msra.mxu0 0.0
        %723 = vmatprep.subr.mxu0 0.0
        %724 = vmatpush1.msra.mxu0 0.0
        %725 = vmatprep.subr.mxu0 0.0
        %726 = vmatpush1.msra.mxu0 0.0
        %727 = vmatprep.subr.mxu0 0.0
        %728 = vmatpush1.msra.mxu0 0.0
        %729 = vmatprep.subr.mxu0 0.0
        %730 = vmatpush1.msra.mxu0 0.0
        %731 = vmatprep.subr.mxu0 0.0
        %732 = vmatpush1.msra.mxu0 0.0
        %733 = vmatprep.subr.mxu0 0.0
        %734 = vmatpush1.msra.mxu0 0.0
        %735 = vmatprep.subr.mxu0 0.0
        %736 = vmatpush1.msra.mxu0 0.0
        %737 = vmatprep.subr.mxu0 0.0
        %738 = vmatpush1.msra.mxu0 0.0
        %739 = vmatprep.mubr.f32.mxu0 0.0
        %740 = vmatmul.mubr.f32.gmra.mrb[0].mxu0 %v652
        %v741 = vpop.f32.mrb[0].mxu0
        %v742 = vadd.f32 %v613, %v741
        %v743 = vpop.f32.mrb[0].mxu0
        %744 = vmatprep.mubr.f32.mxu0 0.0
        %745 = vmatmul.mubr.f32.gmra.mrb[0].mxu0 %v655
        %v746 = vpop.f32.mrb[0].mxu0
        %v747 = vadd.f32 %v618, %v746
        %v748 = vpop.f32.mrb[0].mxu0
        %749 = vmatprep.mubr.f32.mxu0 0.0
        %750 = vmatmul.mubr.f32.gmra.mrb[0].mxu0 %v658
        %v751 = vpop.f32.mrb[0].mxu0
        %v752 = vadd.f32 %v623, %v751
        %v753 = vpop.f32.mrb[0].mxu0
        %754 = vmatprep.mubr.f32.mxu0 0.0
        %755 = vmatmul.mubr.f32.gmra.mrb[0].mxu0 %v661
        %v756 = vpop.f32.mrb[0].mxu0
        %v757 = vadd.f32 %v628, %v756
        %v758 = vpop.f32.mrb[0].mxu0
        %759 = vmatprep.mubr.f32.mxu0 0.0
        %760 = vmatmul.mubr.f32.gmra.mrb[0].mxu0 %v664
        %v761 = vpop.f32.mrb[0].mxu0
        %v762 = vadd.f32 %v633, %v761
        %v763 = vpop.f32.mrb[0].mxu0
        %764 = vmatprep.mubr.f32.mxu0 0.0
        %765 = vmatmul.mubr.f32.gmra.mrb[0].mxu0 %v667
        %v766 = vpop.f32.mrb[0].mxu0
        %v767 = vadd.f32 %v638, %v766
        %v768 = vpop.f32.mrb[0].mxu0
        %769 = vmatprep.mubr.f32.mxu0 0.0
        %770 = vmatmul.mubr.f32.gmra.mrb[0].mxu0 %v670
        %v771 = vpop.f32.mrb[0].mxu0
        %v772 = vadd.f32 %v643, %v771
        %v773 = vpop.f32.mrb[0].mxu0
        %774 = vmatprep.mubr.f32.mxu0 0.0
        %775 = vmatmul.mubr.f32.gmra.mrb[0].mxu0 %v673
        %v776 = vpop.f32.mrb[0].mxu0
        %v777 = vadd.f32 %v648, %v776
        %v778 = vpop.f32.mrb[0].mxu0
        %779 = vdwg.mxu0
        %v780 = vld [vmem:[#allocation11] sm:$0xff]
        %v781 = vld [vmem:[#allocation11 + $0x8] sm:$0xff]
        %v782 = vld [vmem:[#allocation11 + $0x10] sm:$0xff]
        %v783 = vld [vmem:[#allocation11 + $0x18] sm:$0xff]
        %v784 = vld [vmem:[%s5] sm:$0x1]
        %v786 = vlaneseq
        %v787 = vshrl.u32 %v786, 7
        %v788 = vsub.s32 0, %v787
        %v789 = vrot.slane %v784, %v788
        %v791 = vsel %vm521, %v414, 0
        %793 = vmatprep.subr.mxu0 0.0
        %794 = vmatpush1.msra.mxu0 %v780
        %795 = vmatprep.subr.mxu0 0.0
        %796 = vmatpush1.msra.mxu0 %v781
        %797 = vmatprep.subr.mxu0 0.0
        %798 = vmatpush1.msra.mxu0 %v782
        %799 = vmatprep.subr.mxu0 0.0
        %800 = vmatpush1.msra.mxu0 %v783
        %801 = vmatprep.subr.mxu0 0.0
        %802 = vmatpush1.msra.mxu0 0.0
        %803 = vmatprep.subr.mxu0 0.0
        %804 = vmatpush1.msra.mxu0 0.0
        %805 = vmatprep.subr.mxu0 0.0
        %806 = vmatpush1.msra.mxu0 0.0
        %807 = vmatprep.subr.mxu0 0.0
        %808 = vmatpush1.msra.mxu0 0.0
        %809 = vmatprep.subr.mxu0 0.0
        %810 = vmatpush1.msra.mxu0 0.0
        %811 = vmatprep.subr.mxu0 0.0
        %812 = vmatpush1.msra.mxu0 0.0
        %813 = vmatprep.subr.mxu0 0.0
        %814 = vmatpush1.msra.mxu0 0.0
        %815 = vmatprep.subr.mxu0 0.0
        %816 = vmatpush1.msra.mxu0 0.0
        %817 = vmatprep.subr.mxu0 0.0
        %818 = vmatpush1.msra.mxu0 0.0
        %819 = vmatprep.subr.mxu0 0.0
        %820 = vmatpush1.msra.mxu0 0.0
        %821 = vmatprep.subr.mxu0 0.0
        %822 = vmatpush1.msra.mxu0 0.0
        %823 = vmatprep.subr.mxu0 0.0
        %824 = vmatpush1.msra.mxu0 0.0
        %825 = vmatprep.subr.mxu0 0.0
        %826 = vmatpush1.msra.mxu0 0.0
        %827 = vmatprep.subr.mxu0 0.0
        %828 = vmatpush1.msra.mxu0 0.0
        %829 = vmatprep.subr.mxu0 0.0
        %830 = vmatpush1.msra.mxu0 0.0
        %831 = vmatprep.subr.mxu0 0.0
        %832 = vmatpush1.msra.mxu0 0.0
        %833 = vmatprep.subr.mxu0 0.0
        %834 = vmatpush1.msra.mxu0 0.0
        %835 = vmatprep.subr.mxu0 0.0
        %836 = vmatpush1.msra.mxu0 0.0
        %837 = vmatprep.subr.mxu0 0.0
        %838 = vmatpush1.msra.mxu0 0.0
        %839 = vmatprep.subr.mxu0 0.0
        %840 = vmatpush1.msra.mxu0 0.0
        %841 = vmatprep.subr.mxu0 0.0
        %842 = vmatpush1.msra.mxu0 0.0
        %843 = vmatprep.subr.mxu0 0.0
        %844 = vmatpush1.msra.mxu0 0.0
        %845 = vmatprep.subr.mxu0 0.0
        %846 = vmatpush1.msra.mxu0 0.0
        %847 = vmatprep.subr.mxu0 0.0
        %848 = vmatpush1.msra.mxu0 0.0
        %849 = vmatprep.subr.mxu0 0.0
        %850 = vmatpush1.msra.mxu0 0.0
        %851 = vmatprep.subr.mxu0 0.0
        %852 = vmatpush1.msra.mxu0 0.0
        %853 = vmatprep.subr.mxu0 0.0
        %854 = vmatpush1.msra.mxu0 0.0
        %855 = vmatprep.subr.mxu0 0.0
        %856 = vmatpush1.msra.mxu0 0.0
        %857 = vmatprep.mubr.f32.mxu0 0.0
        %858 = vmatmul.mubr.f32.gmra.mrb[0].mxu0 %v791
        %v859 = vpop.f32.mrb[0].mxu0
        %v860 = vadd.f32 %v789, %v859
        %v861 = vpop.f32.mrb[0].mxu0
        %862 = vdwg.mxu0
        %v864 = vcombine.high %v860, %v860
        %v866 = vunpack.c.l.s4 1966171168
        %v867 = vunpack.c.0.s8 %v866
        %v868 = vlaneseq
        %v869 = vshrl.u32 %v868, 7
        %v870 = vsub.s32 %v867, %v869
        %v871 = vrot.slane %v860, %v870
        %v873 = vunpack.c.l.s4 1966171168
        %v874 = vunpack.c.0.s8 %v873
        %v875 = vlaneseq
        %v876 = vshrl.u32 %v875, 7
        %v877 = vsub.s32 %v874, %v876
        %v878 = vrot.slane %v864, %v877
        %v879 = vcombine.high %v871, %v871
        %v880 = vcombine.high %v878, %v878
        %v882 = vunpack.c.l.s4 1966171168
        %v883 = vunpack.c.0.s8 %v882
        %v884 = vlaneseq
        %v885 = vshrl.u32 %v884, 7
        %v886 = vsub.s32 %v883, %v885
        %v887 = vrot.slane %v871, %v886
        %v889 = vunpack.c.l.s4 1966171168
        %v890 = vunpack.c.0.s8 %v889
        %v891 = vlaneseq
        %v892 = vshrl.u32 %v891, 7
        %v893 = vsub.s32 %v890, %v892
        %v894 = vrot.slane %v878, %v893
        %v896 = vunpack.c.l.s4 1966171168
        %v897 = vunpack.c.0.s8 %v896
        %v898 = vlaneseq
        %v899 = vshrl.u32 %v898, 7
        %v900 = vsub.s32 %v897, %v899
        %v901 = vrot.slane %v879, %v900
        %v903 = vunpack.c.l.s4 1966171168
        %v904 = vunpack.c.0.s8 %v903
        %v905 = vlaneseq
        %v906 = vshrl.u32 %v905, 7
        %v907 = vsub.s32 %v904, %v906
        %v908 = vrot.slane %v880, %v907
        %v909 = vcombine.high %v887, %v887
        %v910 = vcombine.high %v894, %v894
        %v911 = vcombine.high %v901, %v901
        %v912 = vcombine.high %v908, %v908
        %v913 = vlaneseq
        %v914 = vshrl.u32 %v913, 7
        %v915 = vsub.s32 0, %v914
        %v916 = vrot.slane %v887, %v915
        %v917 = vlaneseq
        %v918 = vshrl.u32 %v917, 7
        %v919 = vsub.s32 0, %v918
        %v920 = vrot.slane %v901, %v919
        %v921 = vlaneseq
        %v922 = vshrl.u32 %v921, 7
        %v923 = vsub.s32 0, %v922
        %v924 = vrot.slane %v909, %v923
        %v925 = vlaneseq
        %v926 = vshrl.u32 %v925, 7
        %v927 = vsub.s32 0, %v926
        %v928 = vrot.slane %v911, %v927
        %v929 = vlaneseq
        %v930 = vshrl.u32 %v929, 7
        %v931 = vsub.s32 0, %v930
        %v932 = vrot.slane %v894, %v931
        %v933 = vlaneseq
        %v934 = vshrl.u32 %v933, 7
        %v935 = vsub.s32 0, %v934
        %v936 = vrot.slane %v908, %v935
        %v937 = vlaneseq
        %v938 = vshrl.u32 %v937, 7
        %v939 = vsub.s32 0, %v938
        %v940 = vrot.slane %v910, %v939
        %v941 = vlaneseq
        %v942 = vshrl.u32 %v941, 7
        %v943 = vsub.s32 0, %v942
        %v944 = vrot.slane %v912, %v943
        %v953 = vadd.f32 %v742, %v916
        %v954 = vadd.f32 %v747, %v920
        %v955 = vadd.f32 %v752, %v924
        %v956 = vadd.f32 %v757, %v928
        %v957 = vadd.f32 %v762, %v932
        %v958 = vadd.f32 %v767, %v936
        %v959 = vadd.f32 %v772, %v940
        %v960 = vadd.f32 %v777, %v944
        %v961 = vmax.f32 %v953, 0.0
        %v962 = vmax.f32 %v954, 0.0
        %v963 = vmax.f32 %v955, 0.0
        %v964 = vmax.f32 %v956, 0.0
        %v965 = vmax.f32 %v957, 0.0
        %v966 = vmax.f32 %v958, 0.0
        %v967 = vmax.f32 %v959, 0.0
        %v968 = vmax.f32 %v960, 0.0
        %v969 = vld [vmem:[%s6] sm:$0x1]
        %v971 = vlaneseq
        %v972 = vshrl.u32 %v971, 7
        %v973 = vsub.s32 0, %v972
        %v974 = vrot.slane %v969, %v973
        %v976 = vmul.f32 %v961, %v974
        %v977 = vmul.f32 %v962, %v974
        %v978 = vmul.f32 %v963, %v974
        %v979 = vmul.f32 %v964, %v974
        %v980 = vmul.f32 %v965, %v974
        %v981 = vmul.f32 %v966, %v974
        %v982 = vmul.f32 %v967, %v974
        %v983 = vmul.f32 %v968, %v974
        %vm984 = vcmask 523264
        %v985 = vsel %vm984, %v976, 0.0
        %986 = vadd.xlane.f32.xlu0 %v985
        %v987 = vpop.xlane.xlu0 %986
        %v988 = vsel %vm984, %v977, 0.0
        %989 = vadd.xlane.f32.xlu0 %v988
        %v990 = vpop.xlane.xlu0 %989
        %v991 = vsel %vm984, %v978, 0.0
        %992 = vadd.xlane.f32.xlu0 %v991
        %v993 = vpop.xlane.xlu0 %992
        %v994 = vsel %vm984, %v979, 0.0
        %995 = vadd.xlane.f32.xlu0 %v994
        %v996 = vpop.xlane.xlu0 %995
        %v997 = vsel %vm984, %v980, 0.0
        %998 = vadd.xlane.f32.xlu0 %v997
        %v999 = vpop.xlane.xlu0 %998
        %v1000 = vsel %vm984, %v981, 0.0
        %1001 = vadd.xlane.f32.xlu0 %v1000
        %v1002 = vpop.xlane.xlu0 %1001
        %v1003 = vsel %vm984, %v982, 0.0
        %1004 = vadd.xlane.f32.xlu0 %v1003
        %v1005 = vpop.xlane.xlu0 %1004
        %v1006 = vsel %vm984, %v983, 0.0
        %1007 = vadd.xlane.f32.xlu0 %v1006
        %v1008 = vpop.xlane.xlu0 %1007
        %s1009 = sld [smem:[#allocation2]]
        %v1010 = vstv %s1009
        %v1011 = vadd.f32 %v987, %v1010
        %v1012 = vadd.f32 %v990, %v1010
        %v1013 = vadd.f32 %v993, %v1010
        %v1014 = vadd.f32 %v996, %v1010
        %v1015 = vadd.f32 %v999, %v1010
        %v1016 = vadd.f32 %v1002, %v1010
        %v1017 = vadd.f32 %v1005, %v1010
        %v1018 = vadd.f32 %v1008, %v1010
        %v1019 = vxor.u32 %v1011, 2147483648
        %v1020 = vxor.u32 %v1012, 2147483648
        %v1021 = vxor.u32 %v1013, 2147483648
        %v1022 = vxor.u32 %v1014, 2147483648
        %v1023 = vxor.u32 %v1015, 2147483648
        %v1024 = vxor.u32 %v1016, 2147483648
        %v1025 = vxor.u32 %v1017, 2147483648
        %v1026 = vxor.u32 %v1018, 2147483648
        %v1027 = vmul.f32 %v1019, 1.442695
        %v1028 = vpow.pop %v1027
        %v1029 = vmul.f32 %v1020, 1.442695
        %v1030 = vpow.pop %v1029
        %v1031 = vmul.f32 %v1021, 1.442695
        %v1032 = vpow.pop %v1031
        %v1033 = vmul.f32 %v1022, 1.442695
        %v1034 = vpow.pop %v1033
        %v1035 = vmul.f32 %v1023, 1.442695
        %v1036 = vpow.pop %v1035
        %v1037 = vmul.f32 %v1024, 1.442695
        %v1038 = vpow.pop %v1037
        %v1039 = vmul.f32 %v1025, 1.442695
        %v1040 = vpow.pop %v1039
        %v1041 = vmul.f32 %v1026, 1.442695
        %v1042 = vpow.pop %v1041
        %v1043 = vadd.f32 %v1028, 1.0
        %v1044 = vadd.f32 %v1030, 1.0
        %v1045 = vadd.f32 %v1032, 1.0
        %v1046 = vadd.f32 %v1034, 1.0
        %v1047 = vadd.f32 %v1036, 1.0
        %v1048 = vadd.f32 %v1038, 1.0
        %v1049 = vadd.f32 %v1040, 1.0
        %v1050 = vadd.f32 %v1042, 1.0
        %v1051 = vrcp.pop %v1043
        %v1052 = vmul.f32 1.0, %v1051
        %v1053 = vrcp.pop %v1044
        %v1054 = vmul.f32 1.0, %v1053
        %v1055 = vrcp.pop %v1045
        %v1056 = vmul.f32 1.0, %v1055
        %v1057 = vrcp.pop %v1046
        %v1058 = vmul.f32 1.0, %v1057
        %v1059 = vrcp.pop %v1047
        %v1060 = vmul.f32 1.0, %v1059
        %v1061 = vrcp.pop %v1048
        %v1062 = vmul.f32 1.0, %v1061
        %v1063 = vrcp.pop %v1049
        %v1064 = vmul.f32 1.0, %v1063
        %v1065 = vrcp.pop %v1050
        %v1066 = vmul.f32 1.0, %v1065
        %v1067 = vmul.f32 %v1052, %v406
        %v1068 = vmul.f32 %v1054, %v407
        %v1069 = vmul.f32 %v1056, %v408
        %v1070 = vmul.f32 %v1058, %v409
        %v1071 = vmul.f32 %v1060, %v410
        %v1072 = vmul.f32 %v1062, %v411
        %v1073 = vmul.f32 %v1064, %v412
        %v1074 = vmul.f32 %v1066, %v413
        %v1075 = vsel %vm521, %v1067, 0.0
        %v1076 = vrot.slane %v1075, 4
        %v1077 = vadd.f32 %v1075, %v1076
        %v1078 = vrot.slane %v1077, 2
        %v1079 = vadd.f32 %v1077, %v1078
        %v1080 = vrot.slane %v1079, 1
        %v1081 = vadd.f32 %v1079, %v1080
        %v1082 = vsel %vm521, %v1068, 0.0
        %v1083 = vrot.slane %v1082, 4
        %v1084 = vadd.f32 %v1082, %v1083
        %v1085 = vrot.slane %v1084, 2
        %v1086 = vadd.f32 %v1084, %v1085
        %v1087 = vrot.slane %v1086, 1
        %v1088 = vadd.f32 %v1086, %v1087
        %v1089 = vsel %vm521, %v1069, 0.0
        %v1090 = vrot.slane %v1089, 4
        %v1091 = vadd.f32 %v1089, %v1090
        %v1092 = vrot.slane %v1091, 2
        %v1093 = vadd.f32 %v1091, %v1092
        %v1094 = vrot.slane %v1093, 1
        %v1095 = vadd.f32 %v1093, %v1094
        %v1096 = vsel %vm521, %v1070, 0.0
        %v1097 = vrot.slane %v1096, 4
        %v1098 = vadd.f32 %v1096, %v1097
        %v1099 = vrot.slane %v1098, 2
        %v1100 = vadd.f32 %v1098, %v1099
        %v1101 = vrot.slane %v1100, 1
        %v1102 = vadd.f32 %v1100, %v1101
        %v1103 = vsel %vm521, %v1071, 0.0
        %v1104 = vrot.slane %v1103, 4
        %v1105 = vadd.f32 %v1103, %v1104
        %v1106 = vrot.slane %v1105, 2
        %v1107 = vadd.f32 %v1105, %v1106
        %v1108 = vrot.slane %v1107, 1
        %v1109 = vadd.f32 %v1107, %v1108
        %v1110 = vsel %vm521, %v1072, 0.0
        %v1111 = vrot.slane %v1110, 4
        %v1112 = vadd.f32 %v1110, %v1111
        %v1113 = vrot.slane %v1112, 2
        %v1114 = vadd.f32 %v1112, %v1113
        %v1115 = vrot.slane %v1114, 1
        %v1116 = vadd.f32 %v1114, %v1115
        %v1117 = vsel %vm521, %v1073, 0.0
        %v1118 = vrot.slane %v1117, 4
        %v1119 = vadd.f32 %v1117, %v1118
        %v1120 = vrot.slane %v1119, 2
        %v1121 = vadd.f32 %v1119, %v1120
        %v1122 = vrot.slane %v1121, 1
        %v1123 = vadd.f32 %v1121, %v1122
        %v1124 = vsel %vm521, %v1074, 0.0
        %v1125 = vrot.slane %v1124, 4
        %v1126 = vadd.f32 %v1124, %v1125
        %v1127 = vrot.slane %v1126, 2
        %v1128 = vadd.f32 %v1126, %v1127
        %v1129 = vrot.slane %v1128, 1
        %v1130 = vadd.f32 %v1128, %v1129
        %vm1139 = vcmask 1041409
        %v1140 = vsel %vm1139, %v1088, %v1081
        %vm1141 = vcmask 1042434
        %v1142 = vsel %vm1141, %v1095, %v1140
        %vm1143 = vcmask 1043459
        %v1144 = vsel %vm1143, %v1102, %v1142
        %vm1145 = vcmask 1044484
        %v1146 = vsel %vm1145, %v1109, %v1144
        %vm1147 = vcmask 1045509
        %v1148 = vsel %vm1147, %v1116, %v1146
        %vm1149 = vcmask 1046534
        %v1150 = vsel %vm1149, %v1123, %v1148
        %vm1151 = vcmask 1047559
        %v1152 = vsel %vm1151, %v1130, %v1150
        %1154 = vst.msk [vmem:[%s404] sm:$0xff] %vm521, %v1152
        %s1155 = sand.u32 %s216, 1
        %s1156 = scalar_lea.sflag [#allocation5], %s1155
        %s1157 = sand.u32 %s216, 1
        %s1158 = smul.addr %s1157, 8
        %s1159 = scalar_lea.vmem [#allocation12], %s1158
        // Predicated region
        $region73: #{tpu_custom_call.1} parent=51 // pred_check
          %p1160 = pneg %p226
        $region74: #{tpu_custom_call.1} parent=51 // pred_check_branch
          %1162 = sbr.rel (%p1160) target = $region76
        $region75: #{tpu_custom_call.1} parent=51 // pred_region
          %s1164 = ssub.s32 128, 128
          %1165 = vsyncadd %s1156, %s1164
          %s1166 = smul.addr %s30, 128
          %s1167 = scalar_lea.hbm %s8, %s1166
          %s1169 = sshll.u32 %s1159, 4
          %s1170 = int_to_ptr.vmem [resolvable:$true] %s1169
          %1172 = dma.vmem_to_hbm [thread:$0]  %s1170, 128, %s1167, %s1156
        $region76: #{tpu_custom_call.1} parent=51 // pred_fallthru
          _
      $region52: #{tpu_custom_call.1} parent=5 // pred_fallthru
        _
      %p1173 = scmp.le.s32.totalorder 2, %s25
      // Predicated region
      $region77: #{tpu_custom_call.1} parent=5 // pred_check
        %p1174 = pneg %p1173
      $region78: #{tpu_custom_call.1} parent=5 // pred_check_branch
        %1176 = sbr.rel (%p1174) target = $region80
      $region79: #{tpu_custom_call.1} parent=5 // pred_region
        %s1177 = ssub.s32 %s25, 2
        // Predicated region
        $region81: #{tpu_custom_call.1} parent=79 // pred_check
          %p1178 = pneg %p232
        $region82: #{tpu_custom_call.1} parent=79 // pred_check_branch
          %1180 = sbr.rel (%p1178) target = $region84
        $region83: #{tpu_custom_call.1} parent=79 // pred_region
          %s1181 = sand.u32 %s217, 1
          %s1182 = scalar_lea.sflag [#allocation5], %s1181
          %s1183 = sand.u32 %s217, 1
          %s1184 = smul.addr %s1183, 8
          %s1185 = scalar_lea.vmem [#allocation12], %s1184
          %1186 = dma.done %s1182, 128
        $region84: #{tpu_custom_call.1} parent=79 // pred_fallthru
          _
      $region80: #{tpu_custom_call.1} parent=5 // pred_fallthru
        _
    $region6: #{tpu_custom_call.1} parent=1 // loop_footer
      %s29 = sadd.s32 1, %s25
    $region7: #{tpu_custom_call.1} parent=1 // loop_footer_branch
      %24 = sbr.rel target = $region3
    $region8: #{tpu_custom_call.1} parent=1 // loop_exit
      _
    %1187 = vsyncpa [#allocation4], 1
    %s1188 = scalar_lea.sflag [#allocation4], 1
    %1189 = vsyncpa %s1188, 1
    %1190 = vsyncpa [#allocation7], 1
    %s1191 = scalar_lea.sflag [#allocation7], 1
    %1192 = vsyncpa %s1191, 1
    %1193 = vsyncpa [#allocation10], 1
    %1194 = vsyncpa [#allocation5], 1
    %s1195 = scalar_lea.sflag [#allocation5], 1
    %1196 = vsyncpa %s1195, 1

</llo_original>
